<compile_context>
chip_gen: v6e
topology: v6e:2x2x1
jax: 0.10.0
libtpu: 0.0.40
codegen_flags: <defaults>
</compile_context>

<pallas_src>
import functools

import jax
import jax.numpy as jnp
from jax.experimental import pallas as pl
from jax.experimental.pallas import tpu as pltpu

INPUT_DIM = 7
HIDDEN_DIM = 128
OUTPUT_DIM = 10

K_PAD = 8        # layer-1 contraction padded to one f32 sublane
N3_PAD = 128     # layer-3 matmul width kept MXU-aligned (sliced before the store)
MAX_TILE = 4096  # VMEM cap (v7x 64 MiB part)
MIN_SPLIT = 1024 # don't split the batch for v7x below this per-TC size


def _round_up(x, m):
    return (x + m - 1) // m * m


def _mlp_kernel(x_ref, w1_ref, b1_ref, w2_ref, b2_ref, w3_ref, b3_ref, o_ref):
    # Layer 1: f32 MXU matmul (K=8, negligible cost), f32 bias/ReLU on the VPU.
    h1 = jnp.dot(x_ref[...], w1_ref[...], preferred_element_type=jnp.float32)
    h1 = jnp.maximum(h1 + b1_ref[...], 0.0).astype(jnp.bfloat16)

    # Layer 2: bf16 MXU inputs, f32 accumulation.
    h2 = jnp.dot(h1, w2_ref[...], preferred_element_type=jnp.float32)
    h2 = jnp.maximum(h2 + b2_ref[...], 0.0).astype(jnp.bfloat16)

    # Layer 3: aligned 128-wide matmul, then slice back to the 10 real output
    # features so only 40 B/row of f32 is stored / written back to HBM.
    out = jnp.dot(h2, w3_ref[...], preferred_element_type=jnp.float32) + b3_ref[...]
    o_ref[...] = out[:, :OUTPUT_DIM]


def prepare_params(params):
    """One-time device-side prep (cast/pad) of raw f32 params for the kernel."""
    w1 = jnp.pad(params["w1"].astype(jnp.float32), ((0, K_PAD - INPUT_DIM), (0, 0)))
    b1 = params["b1"].astype(jnp.float32)
    w2 = params["w2"].astype(jnp.bfloat16)
    b2 = params["b2"].astype(jnp.float32)
    w3 = jnp.pad(params["w3"].astype(jnp.bfloat16), ((0, 0), (0, N3_PAD - OUTPUT_DIM)))
    b3 = jnp.pad(params["b3"].astype(jnp.float32), ((0, 0), (0, N3_PAD - OUTPUT_DIM)))
    return {"w1": w1, "b1": b1, "w2": w2, "b2": b2, "w3": w3, "b3": b3}


@functools.partial(jax.jit, static_argnames=("batch_tile",))
def mardam_forward(x, prepped, batch_tile=2048):
    """x: (B, INPUT_DIM) float32. prepped: output of prepare_params()."""
    B = x.shape[0]

    # Big tiles amortize the ~0.35 us/step overhead; clamp for tiny batches,
    # cap for v7x VMEM, round to 16 rows (bf16 sublane packing).
    tile = min(_round_up(batch_tile, 16), _round_up(B, 16), MAX_TILE)
    # Keep >= 2 grid steps for batches big enough to split, so the "parallel"
    # batch axis actually feeds both v7x TensorCores.
    if B >= 2 * MIN_SPLIT and pl.cdiv(B, tile) < 2:
        tile = max(MIN_SPLIT, _round_up(pl.cdiv(B, 2), 16))
    grid = (pl.cdiv(B, tile),)  # ragged last block handled by Pallas

    # Only remaining wrapper pass: 7 -> 8 lane pad (stays f32, ~32 B/row).
    xp = jnp.pad(x, ((0, 0), (0, K_PAD - INPUT_DIM)))

    rep = lambda shape: pl.BlockSpec(shape, lambda i: (0, 0))  # grid-invariant block

    out = pl.pallas_call(
        _mlp_kernel,
        out_shape=jax.ShapeDtypeStruct((B, OUTPUT_DIM), jnp.float32),
        grid_spec=pltpu.PrefetchScalarGridSpec(
            num_scalar_prefetch=0,
            grid=grid,
            in_specs=[
                pl.BlockSpec((tile, K_PAD), lambda i: (i, 0)),  # x tile (batch-tiled)
                rep((K_PAD, HIDDEN_DIM)),        # w1 (f32)
                rep((1, HIDDEN_DIM)),            # b1
                rep((HIDDEN_DIM, HIDDEN_DIM)),   # w2 (bf16)
                rep((1, HIDDEN_DIM)),            # b2
                rep((HIDDEN_DIM, N3_PAD)),       # w3 (bf16, lane-padded)
                rep((1, N3_PAD)),                # b3 (lane-padded)
            ],
            out_specs=pl.BlockSpec((tile, OUTPUT_DIM), lambda i: (i, 0)),
        ),
        compiler_params=pltpu.CompilerParams(
            dimension_semantics=("parallel",),   # batch axis shards over v7x's 2 TCs
            vmem_limit_bytes=32 * 1024 * 1024,   # plenty for tile<=4096 (~13 MB peak)
        ),
    )(xp, prepped["w1"], prepped["b1"], prepped["w2"], prepped["b2"],
      prepped["w3"], prepped["b3"])

    return out


def init_params(key):
    """Deterministic init mimicking PyTorch nn.Linear default (U[-1/sqrt(fan_in), +])."""
    def linear(key, fan_in, fan_out):
        kw, kb = jax.random.split(key)
        bound = 1.0 / jnp.sqrt(fan_in)
        # Stored pre-transposed: (in, out), so kernel computes x @ W + b
        # (== x @ W.T + b with the torch (out, in) weight).
        w = jax.random.uniform(kw, (fan_in, fan_out), jnp.float32, -bound, bound)
        b = jax.random.uniform(kb, (1, fan_out), jnp.float32, -bound, bound)
        return w, b

    k1, k2, k3 = jax.random.split(key, 3)
    w1, b1 = linear(k1, INPUT_DIM, HIDDEN_DIM)
    w2, b2 = linear(k2, HIDDEN_DIM, HIDDEN_DIM)
    w3, b3 = linear(k3, HIDDEN_DIM, OUTPUT_DIM)
    return {"w1": w1, "b1": b1, "w2": w2, "b2": b2, "w3": w3, "b3": b3}


def reference_forward(x, params):
    """Pure-JAX reference with the same numerics (f32 layer 1, bf16 layers 2-3)."""
    def mm_bf16(a, w):
        return jnp.dot(a.astype(jnp.bfloat16), w.astype(jnp.bfloat16),
                       preferred_element_type=jnp.float32)

    h1 = jnp.maximum(jnp.dot(x, params["w1"],
                             preferred_element_type=jnp.float32) + params["b1"], 0.0)
    h2 = jnp.maximum(mm_bf16(h1, params["w2"]) + params["b2"], 0.0)
    return mm_bf16(h2, params["w3"]) + params["b3"]


if __name__ == "__main__":
    key = jax.random.PRNGKey(0)
    kx, kp = jax.random.split(key)
    params = init_params(kp)
    prepped = prepare_params(params)

    # Small batch (single tile, grid = 1).
    B = 16
    x = jax.random.normal(kx, (B, INPUT_DIM), jnp.float32)
    out = jax.block_until_ready(mardam_forward(x, prepped))
    ref = reference_forward(x, params)
    assert out.shape == (B, OUTPUT_DIM)
    assert jnp.allclose(out, ref, atol=2e-2, rtol=2e-2), "mismatch vs JAX reference (B=16)"

    # Ragged batch exercising the multi-step grid + clamped boundary block.
    B2 = 300
    x2 = jax.random.normal(kx, (B2, INPUT_DIM), jnp.float32)
    out2 = jax.block_until_ready(mardam_forward(x2, prepped, batch_tile=128))
    ref2 = reference_forward(x2, params)
    assert out2.shape == (B2, OUTPUT_DIM)
    assert jnp.allclose(out2, ref2, atol=2e-2, rtol=2e-2), "mismatch vs JAX reference (B=300)"

    print("KERNEL_OK")
</pallas_src>

<mosaic_0001>
module attributes {stable_mosaic.version = 11 : i64} {
  func.func @_mlp_kernel(%arg0: i32, %arg1: memref<16x8xf32, #tpu.memory_space<vmem>>, %arg2: memref<8x128xf32, #tpu.memory_space<vmem>>, %arg3: memref<1x128xf32, #tpu.memory_space<vmem>>, %arg4: memref<128x128xbf16, #tpu.memory_space<vmem>>, %arg5: memref<1x128xf32, #tpu.memory_space<vmem>>, %arg6: memref<128x128xbf16, #tpu.memory_space<vmem>>, %arg7: memref<1x128xf32, #tpu.memory_space<vmem>>, %arg8: memref<16x10xf32, #tpu.memory_space<vmem>>) attributes {dimension_semantics = [#tpu.dimension_semantics<parallel>], iteration_bounds = array<i64: 1>, scalar_prefetch = 0 : i64, scratch_operands = 0 : i64, tpu.core_type = #tpu.core_type<tc>, window_params = [{transform_indices = @transform_0, window_bounds = array<i64: 16, 8>}, {pipeline_mode = #tpu.pipeline_mode<synchronous>, transform_indices = @transform_1, window_bounds = array<i64: 8, 128>}, {pipeline_mode = #tpu.pipeline_mode<synchronous>, transform_indices = @transform_2, window_bounds = array<i64: 1, 128>}, {pipeline_mode = #tpu.pipeline_mode<synchronous>, transform_indices = @transform_3, window_bounds = array<i64: 128, 128>}, {pipeline_mode = #tpu.pipeline_mode<synchronous>, transform_indices = @transform_4, window_bounds = array<i64: 1, 128>}, {pipeline_mode = #tpu.pipeline_mode<synchronous>, transform_indices = @transform_5, window_bounds = array<i64: 128, 128>}, {pipeline_mode = #tpu.pipeline_mode<synchronous>, transform_indices = @transform_6, window_bounds = array<i64: 1, 128>}, {transform_indices = @transform_7, window_bounds = array<i64: 16, 10>}]} {
    %c0 = arith.constant 0 : index
    %c0_0 = arith.constant 0 : index
    %0 = vector.load %arg1[%c0, %c0_0] : memref<16x8xf32, #tpu.memory_space<vmem>>, vector<16x8xf32>
    %c0_1 = arith.constant 0 : index
    %c0_2 = arith.constant 0 : index
    %1 = vector.load %arg2[%c0_1, %c0_2] : memref<8x128xf32, #tpu.memory_space<vmem>>, vector<8x128xf32>
    %cst = arith.constant dense<0.000000e+00> : vector<16x128xf32>
    %2 = tpu.matmul %0, %1, %cst {dimension_numbers = #tpu.dot_dimension_numbers<[1], [0], [0], [1], [0, 0, 1, 1], [], []>} : vector<16x8xf32>, vector<8x128xf32>, vector<16x128xf32> -> vector<16x128xf32>
    %c0_3 = arith.constant 0 : index
    %c0_4 = arith.constant 0 : index
    %3 = vector.load %arg3[%c0_3, %c0_4] : memref<1x128xf32, #tpu.memory_space<vmem>>, vector<1x128xf32>
    %4 = vector.broadcast %3 : vector<1x128xf32> to vector<16x128xf32>
    %5 = arith.addf %2, %4 : vector<16x128xf32>
    %cst_5 = arith.constant 0.000000e+00 : f32
    %6 = vector.broadcast %cst_5 : f32 to vector<16x128xf32>
    %7 = arith.maximumf %5, %6 : vector<16x128xf32>
    %8 = arith.truncf %7 : vector<16x128xf32> to vector<16x128xbf16>
    %c0_6 = arith.constant 0 : index
    %c0_7 = arith.constant 0 : index
    %9 = vector.load %arg4[%c0_6, %c0_7] : memref<128x128xbf16, #tpu.memory_space<vmem>>, vector<128x128xbf16>
    %cst_8 = arith.constant dense<0.000000e+00> : vector<16x128xf32>
    %10 = tpu.matmul %8, %9, %cst_8 {dimension_numbers = #tpu.dot_dimension_numbers<[1], [0], [0], [1], [0, 0, 1, 1], [], []>} : vector<16x128xbf16>, vector<128x128xbf16>, vector<16x128xf32> -> vector<16x128xf32>
    %c0_9 = arith.constant 0 : index
    %c0_10 = arith.constant 0 : index
    %11 = vector.load %arg5[%c0_9, %c0_10] : memref<1x128xf32, #tpu.memory_space<vmem>>, vector<1x128xf32>
    %12 = vector.broadcast %11 : vector<1x128xf32> to vector<16x128xf32>
    %13 = arith.addf %10, %12 : vector<16x128xf32>
    %cst_11 = arith.constant 0.000000e+00 : f32
    %14 = vector.broadcast %cst_11 : f32 to vector<16x128xf32>
    %15 = arith.maximumf %13, %14 : vector<16x128xf32>
    %16 = arith.truncf %15 : vector<16x128xf32> to vector<16x128xbf16>
    %c0_12 = arith.constant 0 : index
    %c0_13 = arith.constant 0 : index
    %17 = vector.load %arg6[%c0_12, %c0_13] : memref<128x128xbf16, #tpu.memory_space<vmem>>, vector<128x128xbf16>
    %cst_14 = arith.constant dense<0.000000e+00> : vector<16x128xf32>
    %18 = tpu.matmul %16, %17, %cst_14 {dimension_numbers = #tpu.dot_dimension_numbers<[1], [0], [0], [1], [0, 0, 1, 1], [], []>} : vector<16x128xbf16>, vector<128x128xbf16>, vector<16x128xf32> -> vector<16x128xf32>
    %c0_15 = arith.constant 0 : index
    %c0_16 = arith.constant 0 : index
    %19 = vector.load %arg7[%c0_15, %c0_16] : memref<1x128xf32, #tpu.memory_space<vmem>>, vector<1x128xf32>
    %20 = vector.broadcast %19 : vector<1x128xf32> to vector<16x128xf32>
    %21 = arith.addf %18, %20 : vector<16x128xf32>
    %22 = vector.extract_strided_slice %21 {offsets = [0, 0], sizes = [16, 10], strides = [1, 1]} : vector<16x128xf32> to vector<16x10xf32>
    %c0_17 = arith.constant 0 : index
    %c0_18 = arith.constant 0 : index
    %23 = vector.load %arg8[%c0_17, %c0_18] : memref<16x10xf32, #tpu.memory_space<vmem>>, vector<16x10xf32>
    tpu.vector_store %arg8[%c0_17, %c0_18], %22 {strides = array<i32>} : memref<16x10xf32, #tpu.memory_space<vmem>>, vector<16x10xf32>,
    return
  }
  func.func @transform_0(%arg0: i32) -> (i32, i32) {
    %c0_i32 = arith.constant 0 : i32
    %c0_i32_0 = arith.constant 0 : i32
    return %arg0, %c0_i32 : i32, i32
  }
  func.func @transform_1(%arg0: i32) -> (i32, i32) {
    %c0_i32 = arith.constant 0 : i32
    %c0_i32_0 = arith.constant 0 : i32
    %c0_i32_1 = arith.constant 0 : i32
    return %c0_i32, %c0_i32_0 : i32, i32
  }
  func.func @transform_2(%arg0: i32) -> (i32, i32) {
    %c0_i32 = arith.constant 0 : i32
    %c0_i32_0 = arith.constant 0 : i32
    %c0_i32_1 = arith.constant 0 : i32
    return %c0_i32, %c0_i32_0 : i32, i32
  }
  func.func @transform_3(%arg0: i32) -> (i32, i32) {
    %c0_i32 = arith.constant 0 : i32
    %c0_i32_0 = arith.constant 0 : i32
    %c0_i32_1 = arith.constant 0 : i32
    return %c0_i32, %c0_i32_0 : i32, i32
  }
  func.func @transform_4(%arg0: i32) -> (i32, i32) {
    %c0_i32 = arith.constant 0 : i32
    %c0_i32_0 = arith.constant 0 : i32
    %c0_i32_1 = arith.constant 0 : i32
    return %c0_i32, %c0_i32_0 : i32, i32
  }
  func.func @transform_5(%arg0: i32) -> (i32, i32) {
    %c0_i32 = arith.constant 0 : i32
    %c0_i32_0 = arith.constant 0 : i32
    %c0_i32_1 = arith.constant 0 : i32
    return %c0_i32, %c0_i32_0 : i32, i32
  }
  func.func @transform_6(%arg0: i32) -> (i32, i32) {
    %c0_i32 = arith.constant 0 : i32
    %c0_i32_0 = arith.constant 0 : i32
    %c0_i32_1 = arith.constant 0 : i32
    return %c0_i32, %c0_i32_0 : i32, i32
  }
  func.func @transform_7(%arg0: i32) -> (i32, i32) {
    %c0_i32 = arith.constant 0 : i32
    %c0_i32_0 = arith.constant 0 : i32
    return %arg0, %c0_i32 : i32, i32
  }
}

</mosaic_0001>

<llo_original>
// kernel: mardam_forward.1
$region0: #{mardam_forward.1}
  #allocation0 [shape = 'u32[]', space=smem, size = 0x4, offset = 0x4, fixed_abs, tag = 'smem constant byte address 0x4 - core index']
  #allocation1 [shape = 'u32[144,128]{1,0:T(1,128)}', space=vmem, size = 0x12000, scoped, tag = 'internal scratch']
  %s0 = inlined_call_operand.vmem [shape: f32[16,8], index: 0, kind: input, shape index: {}]
  %s1 = inlined_call_operand.hbm [shape: f32[8,128], index: 1, kind: input, shape index: {}]
  %s2 = inlined_call_operand.vmem [shape: f32[1,128], index: 2, kind: input, shape index: {}]
  %s3 = inlined_call_operand.vmem [shape: bf16[128,128], index: 3, kind: input, shape index: {}]
  %s4 = inlined_call_operand.vmem [shape: f32[1,128], index: 4, kind: input, shape index: {}]
  %s5 = inlined_call_operand.hbm [shape: bf16[128,128], index: 5, kind: input, shape index: {}]
  %s6 = inlined_call_operand.hbm [shape: f32[1,128], index: 6, kind: input, shape index: {}]
  %s7 = inlined_call_operand.hbm [shape: f32[16,10], index: 7, kind: output, shape index: {}]
  %s8 = sld [smem:[#allocation0]]
  $region50: #{mardam_forward.1} parent=0
    _
  %s10 = ssub.s32 1, %s8
  %s11 = scalar_select 0, %s10, %s8
  $region1: #{mardam_forward.1} parent=0
    #allocation2 [shape = 'u8[4096]{0}', space=vmem, size = 0x1000, scoped, tag = 'input window, operand 1, single buffered']
    #allocation3 [shape = 's32[1]{0}', space=sflag, size = 0x4, scoped, tag = 'scoped memory for mardam_forward.1']
    #allocation4 [shape = 's32[1]{0}', space=sflag, size = 0x4, scoped, tag = 'scoped memory for mardam_forward.1']
    #allocation5 [shape = 'u8[32768]{0}', space=vmem, size = 0x8000, scoped, tag = 'input window, operand 5, single buffered']
    #allocation6 [shape = 's32[1]{0}', space=sflag, size = 0x4, scoped, tag = 'scoped memory for mardam_forward.1']
    #allocation7 [shape = 'u8[512]{0}', space=vmem, size = 0x400, scoped, tag = 'input window, operand 6, single buffered']
    #allocation8 [shape = 'u8[8192]{0}', space=vmem, size = 0x2000, scoped, tag = 'output window, operand 0, single buffered']
    %12 = vsyncpa [#allocation3], 0
    %13 = vsyncpa [#allocation6], 0
    %14 = vsyncpa [#allocation4], 0
    // Predicated region
    $region2: #{mardam_forward.1} parent=1 // pred_check
      _
    $region3: #{mardam_forward.1} parent=1 // pred_check_branch
      %16 = sbr.rel (0) target = $region5
    $region4: #{mardam_forward.1} parent=1 // pred_region
      _
    $region5: #{mardam_forward.1} parent=1 // pred_fallthru
      _
    // Predicated region
    $region6: #{mardam_forward.1} parent=1 // pred_check
      _
    $region7: #{mardam_forward.1} parent=1 // pred_check_branch
      %18 = sbr.rel (0) target = $region9
    $region8: #{mardam_forward.1} parent=1 // pred_region
      %s20 = ssub.s32 128, 128
      %21 = vsyncadd [#allocation3], %s20
      %s23 = sshll.u32 [#allocation2], 4
      %s24 = int_to_ptr.vmem [resolvable:$true] %s23
      %26 = dma.hbm_to_vmem [thread:$0]  %s1, 128, %s24, [#allocation3]
    $region9: #{mardam_forward.1} parent=1 // pred_fallthru
      _
    // Predicated region
    $region10: #{mardam_forward.1} parent=1 // pred_check
      _
    $region11: #{mardam_forward.1} parent=1 // pred_check_branch
      %28 = sbr.rel (0) target = $region13
    $region12: #{mardam_forward.1} parent=1 // pred_region
      _
    $region13: #{mardam_forward.1} parent=1 // pred_fallthru
      _
    // Predicated region
    $region14: #{mardam_forward.1} parent=1 // pred_check
      _
    $region15: #{mardam_forward.1} parent=1 // pred_check_branch
      %30 = sbr.rel (0) target = $region17
    $region16: #{mardam_forward.1} parent=1 // pred_region
      _
    $region17: #{mardam_forward.1} parent=1 // pred_fallthru
      _
    // Predicated region
    $region18: #{mardam_forward.1} parent=1 // pred_check
      _
    $region19: #{mardam_forward.1} parent=1 // pred_check_branch
      %32 = sbr.rel (0) target = $region21
    $region20: #{mardam_forward.1} parent=1 // pred_region
      _
    $region21: #{mardam_forward.1} parent=1 // pred_fallthru
      _
    // Predicated region
    $region22: #{mardam_forward.1} parent=1 // pred_check
      _
    $region23: #{mardam_forward.1} parent=1 // pred_check_branch
      %34 = sbr.rel (0) target = $region25
    $region24: #{mardam_forward.1} parent=1 // pred_region
      %s36 = ssub.s32 1024, 1024
      %37 = vsyncadd [#allocation6], %s36
      %s38 = sshll.u32 [#allocation5], 4
      %s39 = int_to_ptr.vmem [resolvable:$true] %s38
      %44 = dma.hbm_to_vmem [thread:$0]  %s5, 1024, %s39, [#allocation6], 64, 64, 4
    $region25: #{mardam_forward.1} parent=1 // pred_fallthru
      _
    // Predicated region
    $region26: #{mardam_forward.1} parent=1 // pred_check
      _
    $region27: #{mardam_forward.1} parent=1 // pred_check_branch
      %46 = sbr.rel (0) target = $region29
    $region28: #{mardam_forward.1} parent=1 // pred_region
      %s48 = ssub.s32 16, 16
      %49 = vsyncadd [#allocation6], %s48
      %s51 = sshll.u32 [#allocation7], 4
      %s52 = int_to_ptr.vmem [resolvable:$true] %s51
      %54 = dma.hbm_to_vmem [thread:$0]  %s6, 16, %s52, [#allocation6]
    $region29: #{mardam_forward.1} parent=1 // pred_fallthru
      _
    // Predicated region
    $region30: #{mardam_forward.1} parent=1 // pred_check
      _
    $region31: #{mardam_forward.1} parent=1 // pred_check_branch
      %56 = sbr.rel (0) target = $region33
    $region32: #{mardam_forward.1} parent=1 // pred_region
      %57 = dma.done [#allocation3], 128
    $region33: #{mardam_forward.1} parent=1 // pred_fallthru
      _
    // Predicated region
    $region34: #{mardam_forward.1} parent=1 // pred_check
      _
    $region35: #{mardam_forward.1} parent=1 // pred_check_branch
      %59 = sbr.rel (0) target = $region37
    $region36: #{mardam_forward.1} parent=1 // pred_region
      %60 = dma.done [#allocation6], 1024
    $region37: #{mardam_forward.1} parent=1 // pred_fallthru
      _
    // Predicated region
    $region38: #{mardam_forward.1} parent=1 // pred_check
      _
    $region39: #{mardam_forward.1} parent=1 // pred_check_branch
      %62 = sbr.rel (0) target = $region41
    $region40: #{mardam_forward.1} parent=1 // pred_region
      %63 = dma.done [#allocation6], 16
    $region41: #{mardam_forward.1} parent=1 // pred_fallthru
      _
    %v65 = vld [vmem:[%s0] sm:$0xff]
    %v66 = vld [vmem:[%s0 + $0x8] sm:$0xff]
    %v67 = vld [vmem:[#allocation2] sm:$0xff]
    %v68 = vld [vmem:[%s2] sm:$0x1]
    %v70 = vlaneseq
    %v71 = vshrl.u32 %v70, 7
    %v72 = vsub.s32 0, %v71
    %v73 = vrot.slane %v68, %v72
    %vm75 = vcmask 64512
    %v77 = vsel %vm75, %v65, 0
    %v80 = vsel %vm75, %v66, 0
    %82 = vmatprep.subr.mxu0 0.0
    %83 = vmatpush1.msra.mxu0 0.0
    %84 = vmatprep.subr.mxu0 0.0
    %85 = vmatpush1.msra.mxu0 0.0
    %86 = vmatprep.subr.mxu0 0.0
    %87 = vmatpush1.msra.mxu0 0.0
    %88 = vmatprep.subr.mxu0 0.0
    %89 = vmatpush1.msra.mxu0 0.0
    %90 = vmatprep.subr.mxu0 0.0
    %91 = vmatpush1.msra.mxu0 0.0
    %92 = vmatprep.subr.mxu0 0.0
    %93 = vmatpush1.msra.mxu0 0.0
    %94 = vmatprep.subr.mxu0 0.0
    %95 = vmatpush1.msra.mxu0 0.0
    %96 = vmatprep.subr.mxu0 0.0
    %97 = vmatpush1.msra.mxu0 0.0
    %98 = vmatprep.subr.mxu0 0.0
    %99 = vmatpush1.msra.mxu0 0.0
    %100 = vmatprep.subr.mxu0 0.0
    %101 = vmatpush1.msra.mxu0 0.0
    %102 = vmatprep.subr.mxu0 0.0
    %103 = vmatpush1.msra.mxu0 0.0
    %104 = vmatprep.subr.mxu0 0.0
    %105 = vmatpush1.msra.mxu0 0.0
    %106 = vmatprep.subr.mxu0 0.0
    %107 = vmatpush1.msra.mxu0 0.0
    %108 = vmatprep.subr.mxu0 0.0
    %109 = vmatpush1.msra.mxu0 0.0
    %110 = vmatprep.subr.mxu0 0.0
    %111 = vmatpush1.msra.mxu0 0.0
    %112 = vmatprep.subr.mxu0 0.0
    %113 = vmatpush1.msra.mxu0 %v67
    %114 = vmatprep.subr.mxu0 0.0
    %115 = vmatpush2.msra.mxu0 0.0
    %116 = vmatprep.subr.mxu0 0.0
    %117 = vmatpush2.msra.mxu0 0.0
    %118 = vmatprep.subr.mxu0 0.0
    %119 = vmatpush2.msra.mxu0 0.0
    %120 = vmatprep.subr.mxu0 0.0
    %121 = vmatpush2.msra.mxu0 0.0
    %122 = vmatprep.subr.mxu0 0.0
    %123 = vmatpush2.msra.mxu0 0.0
    %124 = vmatprep.subr.mxu0 0.0
    %125 = vmatpush2.msra.mxu0 0.0
    %126 = vmatprep.subr.mxu0 0.0
    %127 = vmatpush2.msra.mxu0 0.0
    %128 = vmatprep.subr.mxu0 0.0
    %129 = vmatpush2.msra.mxu0 0.0
    %130 = vmatprep.subr.mxu0 0.0
    %131 = vmatpush2.msra.mxu0 0.0
    %132 = vmatprep.subr.mxu0 0.0
    %133 = vmatpush2.msra.mxu0 0.0
    %134 = vmatprep.subr.mxu0 0.0
    %135 = vmatpush2.msra.mxu0 0.0
    %136 = vmatprep.subr.mxu0 0.0
    %137 = vmatpush2.msra.mxu0 0.0
    %138 = vmatprep.subr.mxu0 0.0
    %139 = vmatpush2.msra.mxu0 0.0
    %140 = vmatprep.subr.mxu0 0.0
    %141 = vmatpush2.msra.mxu0 0.0
    %142 = vmatprep.subr.mxu0 0.0
    %143 = vmatpush2.msra.mxu0 0.0
    %144 = vmatprep.subr.mxu0 0.0
    %145 = vmatpush2.msra.mxu0 0.0
    %146 = vmatprep.mubr.f32.mxu0 0.0
    %147 = vmatmul.mubr.f32.gmra.mxu0 %v77
    %v148 = vpop.f32.mrf.mxu0
    %v149 = vadd.f32 %v73, %v148
    %v150 = vpop.f32.mrf.mxu0
    %151 = vmatprep.mubr.f32.mxu0 0.0
    %152 = vmatmul.mubr.f32.gmra.mxu0 %v80
    %v153 = vpop.f32.mrf.mxu0
    %v154 = vadd.f32 %v73, %v153
    %v155 = vpop.f32.mrf.mxu0
    %156 = vdwg.mxu0
    %v157 = vmax.f32 %v149, 0.0
    %v158 = vmax.f32 %v154, 0.0
    %v159 = vpack.c.bf16 %v158, %v157
    %v160 = vld [vmem:[%s3] sm:$0xf]
    %v161 = vld [vmem:[%s3 + $0x4] sm:$0xf]
    %v162 = vld [vmem:[%s3 + $0x8] sm:$0xf]
    %v163 = vld [vmem:[%s3 + $0xc] sm:$0xf]
    %v164 = vld [vmem:[%s3 + $0x10] sm:$0xf]
    %v165 = vld [vmem:[%s3 + $0x14] sm:$0xf]
    %v166 = vld [vmem:[%s3 + $0x18] sm:$0xf]
    %v167 = vld [vmem:[%s3 + $0x1c] sm:$0xf]
    %v168 = vld [vmem:[%s3 + $0x20] sm:$0xf]
    %v169 = vld [vmem:[%s3 + $0x24] sm:$0xf]
    %v170 = vld [vmem:[%s3 + $0x28] sm:$0xf]
    %v171 = vld [vmem:[%s3 + $0x2c] sm:$0xf]
    %v172 = vld [vmem:[%s3 + $0x30] sm:$0xf]
    %v173 = vld [vmem:[%s3 + $0x34] sm:$0xf]
    %v174 = vld [vmem:[%s3 + $0x38] sm:$0xf]
    %v175 = vld [vmem:[%s3 + $0x3c] sm:$0xf]
    %v176 = vld [vmem:[%s4] sm:$0x1]
    %v178 = vlaneseq
    %v179 = vshrl.u32 %v178, 7
    %v180 = vsub.s32 0, %v179
    %v181 = vrot.slane %v176, %v180
    %v199 = vunpack.c.l.b16 %v160
    %v200 = vunpack.c.l.b16 %v161
    %v201 = vunpack.c.l.b16 %v162
    %v202 = vunpack.c.l.b16 %v163
    %v203 = vunpack.c.l.b16 %v164
    %v204 = vunpack.c.l.b16 %v165
    %v205 = vunpack.c.l.b16 %v166
    %v206 = vunpack.c.l.b16 %v167
    %v207 = vunpack.c.l.b16 %v168
    %v208 = vunpack.c.l.b16 %v169
    %v209 = vunpack.c.l.b16 %v170
    %v210 = vunpack.c.l.b16 %v171
    %v211 = vunpack.c.l.b16 %v172
    %v212 = vunpack.c.l.b16 %v173
    %v213 = vunpack.c.l.b16 %v174
    %v214 = vunpack.c.l.b16 %v175
    %v215 = vpack.c.b16 %v200, %v199
    %v216 = vpack.c.b16 %v202, %v201
    %v217 = vpack.c.b16 %v204, %v203
    %v218 = vpack.c.b16 %v206, %v205
    %v219 = vpack.c.b16 %v208, %v207
    %v220 = vpack.c.b16 %v210, %v209
    %v221 = vpack.c.b16 %v212, %v211
    %v222 = vpack.c.b16 %v214, %v213
    %231 = vmatprep.subr.bf16.mxu0 0
    %232 = vmatpush1.bf16.msra.mxu0 %v222
    %233 = vmatprep.subr.bf16.mxu0 0
    %234 = vmatpush1.bf16.msra.mxu0 %v221
    %235 = vmatprep.subr.bf16.mxu0 0
    %236 = vmatpush1.bf16.msra.mxu0 %v220
    %237 = vmatprep.subr.bf16.mxu0 0
    %238 = vmatpush1.bf16.msra.mxu0 %v219
    %239 = vmatprep.subr.bf16.mxu0 0
    %240 = vmatpush1.bf16.msra.mxu0 %v218
    %241 = vmatprep.subr.bf16.mxu0 0
    %242 = vmatpush1.bf16.msra.mxu0 %v217
    %243 = vmatprep.subr.bf16.mxu0 0
    %244 = vmatpush1.bf16.msra.mxu0 %v216
    %245 = vmatprep.subr.bf16.mxu0 0
    %246 = vmatpush1.bf16.msra.mxu0 %v215
    %247 = vmatprep.subr.bf16.mxu0 0
    %248 = vmatpush2.bf16.msra.mxu0 0
    %249 = vmatprep.subr.bf16.mxu0 0
    %250 = vmatpush2.bf16.msra.mxu0 0
    %251 = vmatprep.subr.bf16.mxu0 0
    %252 = vmatpush2.bf16.msra.mxu0 0
    %253 = vmatprep.subr.bf16.mxu0 0
    %254 = vmatpush2.bf16.msra.mxu0 0
    %255 = vmatprep.subr.bf16.mxu0 0
    %256 = vmatpush2.bf16.msra.mxu0 0
    %257 = vmatprep.subr.bf16.mxu0 0
    %258 = vmatpush2.bf16.msra.mxu0 0
    %259 = vmatprep.subr.bf16.mxu0 0
    %260 = vmatpush2.bf16.msra.mxu0 0
    %261 = vmatprep.subr.bf16.mxu0 0
    %262 = vmatpush2.bf16.msra.mxu0 0
    %263 = vmatprep.mubr.bf16.mxu0 0
    %264 = vmatmul.mubr.bf16.gmra.mxu0 %v159
    %v265 = vpop.f32.mrf.mxu0
    %v266 = vadd.f32 %v181, %v265
    %v267 = vpop.f32.mrf.mxu0
    %v268 = vpop.f32.mrf.mxu0
    %v269 = vadd.f32 %v181, %v268
    %v270 = vpop.f32.mrf.mxu0
    %271 = vdwg.mxu0
    %v272 = vmax.f32 %v266, 0.0
    %v273 = vmax.f32 %v269, 0.0
    %v274 = vpack.c.bf16 %v273, %v272
    %v275 = vld [vmem:[#allocation5] sm:$0xf]
    %v276 = vld [vmem:[#allocation5 + $0x4] sm:$0xf]
    %v277 = vld [vmem:[#allocation5 + $0x8] sm:$0xf]
    %v278 = vld [vmem:[#allocation5 + $0xc] sm:$0xf]
    %v279 = vld [vmem:[#allocation5 + $0x10] sm:$0xf]
    %v280 = vld [vmem:[#allocation5 + $0x14] sm:$0xf]
    %v281 = vld [vmem:[#allocation5 + $0x18] sm:$0xf]
    %v282 = vld [vmem:[#allocation5 + $0x1c] sm:$0xf]
    %v283 = vld [vmem:[#allocation5 + $0x20] sm:$0xf]
    %v284 = vld [vmem:[#allocation5 + $0x24] sm:$0xf]
    %v285 = vld [vmem:[#allocation5 + $0x28] sm:$0xf]
    %v286 = vld [vmem:[#allocation5 + $0x2c] sm:$0xf]
    %v287 = vld [vmem:[#allocation5 + $0x30] sm:$0xf]
    %v288 = vld [vmem:[#allocation5 + $0x34] sm:$0xf]
    %v289 = vld [vmem:[#allocation5 + $0x38] sm:$0xf]
    %v290 = vld [vmem:[#allocation5 + $0x3c] sm:$0xf]
    %v291 = vld [vmem:[#allocation7] sm:$0x1]
    %v293 = vlaneseq
    %v294 = vshrl.u32 %v293, 7
    %v295 = vsub.s32 0, %v294
    %v296 = vrot.slane %v291, %v295
    %v314 = vunpack.c.l.b16 %v275
    %v315 = vunpack.c.l.b16 %v276
    %v316 = vunpack.c.l.b16 %v277
    %v317 = vunpack.c.l.b16 %v278
    %v318 = vunpack.c.l.b16 %v279
    %v319 = vunpack.c.l.b16 %v280
    %v320 = vunpack.c.l.b16 %v281
    %v321 = vunpack.c.l.b16 %v282
    %v322 = vunpack.c.l.b16 %v283
    %v323 = vunpack.c.l.b16 %v284
    %v324 = vunpack.c.l.b16 %v285
    %v325 = vunpack.c.l.b16 %v286
    %v326 = vunpack.c.l.b16 %v287
    %v327 = vunpack.c.l.b16 %v288
    %v328 = vunpack.c.l.b16 %v289
    %v329 = vunpack.c.l.b16 %v290
    %v330 = vpack.c.b16 %v315, %v314
    %v331 = vpack.c.b16 %v317, %v316
    %v332 = vpack.c.b16 %v319, %v318
    %v333 = vpack.c.b16 %v321, %v320
    %v334 = vpack.c.b16 %v323, %v322
    %v335 = vpack.c.b16 %v325, %v324
    %v336 = vpack.c.b16 %v327, %v326
    %v337 = vpack.c.b16 %v329, %v328
    %346 = vmatprep.subr.bf16.mxu0 0
    %347 = vmatpush1.bf16.msra.mxu0 %v337
    %348 = vmatprep.subr.bf16.mxu0 0
    %349 = vmatpush1.bf16.msra.mxu0 %v336
    %350 = vmatprep.subr.bf16.mxu0 0
    %351 = vmatpush1.bf16.msra.mxu0 %v335
    %352 = vmatprep.subr.bf16.mxu0 0
    %353 = vmatpush1.bf16.msra.mxu0 %v334
    %354 = vmatprep.subr.bf16.mxu0 0
    %355 = vmatpush1.bf16.msra.mxu0 %v333
    %356 = vmatprep.subr.bf16.mxu0 0
    %357 = vmatpush1.bf16.msra.mxu0 %v332
    %358 = vmatprep.subr.bf16.mxu0 0
    %359 = vmatpush1.bf16.msra.mxu0 %v331
    %360 = vmatprep.subr.bf16.mxu0 0
    %361 = vmatpush1.bf16.msra.mxu0 %v330
    %362 = vmatprep.subr.bf16.mxu0 0
    %363 = vmatpush2.bf16.msra.mxu0 0
    %364 = vmatprep.subr.bf16.mxu0 0
    %365 = vmatpush2.bf16.msra.mxu0 0
    %366 = vmatprep.subr.bf16.mxu0 0
    %367 = vmatpush2.bf16.msra.mxu0 0
    %368 = vmatprep.subr.bf16.mxu0 0
    %369 = vmatpush2.bf16.msra.mxu0 0
    %370 = vmatprep.subr.bf16.mxu0 0
    %371 = vmatpush2.bf16.msra.mxu0 0
    %372 = vmatprep.subr.bf16.mxu0 0
    %373 = vmatpush2.bf16.msra.mxu0 0
    %374 = vmatprep.subr.bf16.mxu0 0
    %375 = vmatpush2.bf16.msra.mxu0 0
    %376 = vmatprep.subr.bf16.mxu0 0
    %377 = vmatpush2.bf16.msra.mxu0 0
    %378 = vmatprep.mubr.bf16.mxu0 0
    %379 = vmatmul.mubr.bf16.gmra.mxu0 %v274
    %v380 = vpop.f32.mrf.mxu0
    %v381 = vadd.f32 %v296, %v380
    %v382 = vpop.f32.mrf.mxu0
    %v383 = vpop.f32.mrf.mxu0
    %v384 = vadd.f32 %v296, %v383
    %v385 = vpop.f32.mrf.mxu0
    %386 = vdwg.mxu0
    %vm387 = vcmask 80896
    %388 = vst.msk [vmem:[#allocation8] sm:$0xff] %vm387, %v381
    %389 = vst.msk [vmem:[#allocation8 + $0x8] sm:$0xff] %vm387, %v384
    // Predicated region
    $region42: #{mardam_forward.1} parent=1 // pred_check
      _
    $region43: #{mardam_forward.1} parent=1 // pred_check_branch
      %391 = sbr.rel (0) target = $region45
    $region44: #{mardam_forward.1} parent=1 // pred_region
      %s393 = ssub.s32 256, 256
      %394 = vsyncadd [#allocation4], %s393
      %s395 = sshll.u32 [#allocation8], 4
      %s396 = int_to_ptr.vmem [resolvable:$true] %s395
      %401 = dma.vmem_to_hbm [thread:$0]  %s396, 256, %s7, [#allocation4], 128, 128, 8
    $region45: #{mardam_forward.1} parent=1 // pred_fallthru
      _
    // Predicated region
    $region46: #{mardam_forward.1} parent=1 // pred_check
      _
    $region47: #{mardam_forward.1} parent=1 // pred_check_branch
      %403 = sbr.rel (0) target = $region49
    $region48: #{mardam_forward.1} parent=1 // pred_region
      %404 = dma.done [#allocation4], 256
    $region49: #{mardam_forward.1} parent=1 // pred_fallthru
      _
    %405 = vsyncpa [#allocation3], 1
    %406 = vsyncpa [#allocation6], 1
    %407 = vsyncpa [#allocation4], 1

</llo_original>
